<compile_context>
chip_gen: v5e
topology: v5e:2x2
jax: 0.10.0
libtpu: 0.0.40
codegen_flags: <defaults>
</compile_context>

<pallas_src>
import math

import jax
import jax.numpy as jnp
from jax import lax
from jax.experimental import pallas as pl
from jax.experimental.pallas import tpu as pltpu

# Layer sizes of the PyTorch module.
F_IN, H1, H2, F_OUT = 4, 5, 4, 1

# Offsets into the packed (54,) parameter vector:
# [w1 (5x4), b1 (5), w2 (4x5), b2 (4), w3 (1x4), b3 (1)], weights in
# PyTorch-native (out, in) layout.
_OFF_W1 = 0
_OFF_B1 = _OFF_W1 + H1 * F_IN          # 20
_OFF_W2 = _OFF_B1 + H1                 # 25
_OFF_B2 = _OFF_W2 + H2 * H1            # 45
_OFF_W3 = _OFF_B2 + H2                 # 49
_OFF_B3 = _OFF_W3 + F_OUT * H2         # 53
_N_PARAMS = _OFF_B3 + F_OUT            # 54

_SUB, _LANES = 8, 128
_CHUNK = _SUB * _LANES                 # 1024 batch elements = one (8,128) f32 vreg


def _cdiv(a, b):
    return -(-a // b)


def _mlp_kernel(wb_ref, x_ref, o_ref):
    """wb_ref: (54,) f32 SMEM.
    x_ref: (F_IN, T, 8, 128) f32 VMEM.  o_ref: (F_OUT, T, 8, 128) f32 VMEM.
    T = number of 1024-element batch chunks in this grid step."""
    # Hoist all 54 scalar parameter reads above the chunk loop (read once).
    w1 = [[wb_ref[_OFF_W1 + j * F_IN + k] for k in range(F_IN)] for j in range(H1)]
    b1 = [wb_ref[_OFF_B1 + j] for j in range(H1)]
    w2 = [[wb_ref[_OFF_W2 + i * H1 + j] for j in range(H1)] for i in range(H2)]
    b2 = [wb_ref[_OFF_B2 + i] for i in range(H2)]
    w3 = [wb_ref[_OFF_W3 + i] for i in range(H2)]
    b3 = wb_ref[_OFF_B3]

    n_chunks = x_ref.shape[1]                 # static at trace time
    # ~4 vregs per live slice per step: 13 live slices (4 x, 5 h1, 4 h2) stays
    # well under the 64-vreg file -> no spills.
    group = math.gcd(n_chunks, 4)             # 1, 2 or 4 chunks per loop step
    n_steps = n_chunks // group
    unroll = min(max(1, 4 // group), n_steps)

    def step(c, carry):
        base = pl.multiple_of(c * group, group)
        xs = [x_ref[k, pl.ds(base, group), :, :] for k in range(F_IN)]  # (group,8,128)

        # layer 1: h1[j] = relu(sum_k w1[j,k] * x[k] + b1[j])  -- VPU broadcast FMAs
        h1 = []
        for j in range(H1):
            acc = xs[0] * w1[j][0]
            for k in range(1, F_IN):
                acc = acc + xs[k] * w1[j][k]
            h1.append(jnp.maximum(acc + b1[j], 0.0))

        # layer 2: h2[i] = relu(sum_j w2[i,j] * h1[j] + b2[i])
        h2 = []
        for i in range(H2):
            acc = h1[0] * w2[i][0]
            for j in range(1, H1):
                acc = acc + h1[j] * w2[i][j]
            h2.append(jnp.maximum(acc + b2[i], 0.0))

        # layer 3 (no activation): out = sum_i w3[i] * h2[i] + b3
        out = h2[0] * w3[0]
        for i in range(1, H2):
            out = out + h2[i] * w3[i]
        out = out + b3

        o_ref[0, pl.ds(base, group), :, :] = out.astype(o_ref.dtype)
        return carry

    lax.fori_loop(0, n_steps, step, 0, unroll=unroll)


def _pack_params(params):
    return jnp.concatenate([
        params["w1"].reshape(-1), params["b1"].reshape(-1),
        params["w2"].reshape(-1), params["b2"].reshape(-1),
        params["w3"].reshape(-1), params["b3"].reshape(-1),
    ]).astype(jnp.float32)


def mlp_forward(x, params, *, tile_b=131072, feature_major=False):
    """Forward pass of the 4->5->4->1 MLP.

    x: (B, 4) by default, or (4, B) with feature_major=True (skips the wrapper
       transpose/relayout entirely).
    params: PyTorch-layout dict {w1:(5,4), b1:(5,), w2:(4,5), b2:(4,), w3:(1,4),
       b3:(1,)}.
    Returns (B, 1).
    """
    wb = _pack_params(params)                               # (54,) -> SMEM

    if feature_major:
        assert x.shape[0] == F_IN, x.shape
        xt = x.astype(jnp.float32)                          # (4, B), no relayout
    else:
        assert x.shape[1] == F_IN, x.shape
        # One HBM relayout (transpose fused with the pad copy by XLA).
        xt = x.astype(jnp.float32).T                        # (4, B)
    B = xt.shape[1]

    # Padding / tiling: pad to whole 1024-element chunks, pick the grid size so
    # each step carries at most tile_b elements and -- when the batch allows --
    # there are >=2 steps (v7x megacore gets both TensorCores busy).  Waste is
    # bounded by ~(grid+1) chunks, not a full tile.
    cap_chunks = max(1, tile_b // _CHUNK)
    n_chunks = _cdiv(B, _CHUNK)
    grid_n = max(_cdiv(n_chunks, cap_chunks), 2 if n_chunks >= 2 else 1)
    cpt = _cdiv(n_chunks, grid_n)                           # chunks per grid step
    tile = cpt * _CHUNK
    b_pad = grid_n * tile

    xt = jnp.pad(xt, ((0, 0), (0, b_pad - B)))              # (4, b_pad)
    x4 = xt.reshape(F_IN, grid_n * cpt, _SUB, _LANES)       # free row-major reshape

    out4 = pl.pallas_call(
        _mlp_kernel,
        out_shape=jax.ShapeDtypeStruct((F_OUT, grid_n * cpt, _SUB, _LANES),
                                       jnp.float32),
        grid=(grid_n,),
        in_specs=[
            pl.BlockSpec(memory_space=pltpu.MemorySpace.SMEM),   # packed params
            pl.BlockSpec((F_IN, cpt, _SUB, _LANES), lambda i: (0, i, 0, 0)),
        ],
        out_specs=pl.BlockSpec((F_OUT, cpt, _SUB, _LANES), lambda i: (0, i, 0, 0)),
        compiler_params=pltpu.CompilerParams(
            dimension_semantics=("parallel",),                   # v7x: 2 TCs
        ),
        cost_estimate=pl.CostEstimate(
            flops=2 * (F_IN * H1 + H1 * H2 + H2 * F_OUT) * b_pad,
            transcendentals=0,
            bytes_accessed=(F_IN + F_OUT) * 4 * b_pad + _N_PARAMS * 4,
        ),
    )(wb, x4)

    out = out4.reshape(b_pad)[:B]                            # free reshape + slice
    return out[:, None].astype(x.dtype)                      # (B, 1)


def init_params(key):
    """Deterministic init mimicking nn.Linear's U(-1/sqrt(fan_in), ...), PyTorch layout."""
    def linear(k, fan_in, fan_out):
        kw, kb = jax.random.split(k)
        bound = 1.0 / jnp.sqrt(jnp.float32(fan_in))
        w = jax.random.uniform(kw, (fan_out, fan_in), jnp.float32, -bound, bound)
        b = jax.random.uniform(kb, (fan_out,), jnp.float32, -bound, bound)
        return w, b

    k1, k2, k3 = jax.random.split(key, 3)
    w1, b1 = linear(k1, F_IN, H1)
    w2, b2 = linear(k2, H1, H2)
    w3, b3 = linear(k3, H2, F_OUT)
    return {"w1": w1, "b1": b1, "w2": w2, "b2": b2, "w3": w3, "b3": b3}


def mlp_reference(x, params):
    h = jnp.maximum(x @ params["w1"].T + params["b1"], 0.0)
    h = jnp.maximum(h @ params["w2"].T + params["b2"], 0.0)
    return h @ params["w3"].T + params["b3"]


if __name__ == "__main__":
    key = jax.random.PRNGKey(0)
    kx, kp = jax.random.split(key)
    x = jax.random.normal(kx, (2, F_IN), jnp.float32)
    params = init_params(kp)

    out = jax.block_until_ready(mlp_forward(x, params))
    ref = mlp_reference(x, params)

    assert out.shape == (2, 1), out.shape
    assert jnp.allclose(out, ref, atol=1e-5, rtol=1e-5), (out, ref)
    print("KERNEL_OK")
</pallas_src>

<mosaic_0001>
module attributes {stable_mosaic.version = 11 : i64} {
  func.func @_mlp_kernel(%arg0: i32, %arg1: memref<54xf32, #tpu.memory_space<smem>>, %arg2: memref<4x1x8x128xf32, #tpu.memory_space<vmem>>, %arg3: memref<1x1x8x128xf32, #tpu.memory_space<vmem>>) attributes {dimension_semantics = [#tpu.dimension_semantics<parallel>], iteration_bounds = array<i64: 1>, scalar_prefetch = 0 : i64, scratch_operands = 0 : i64, tpu.core_type = #tpu.core_type<tc>, window_params = [{transform_indices = @transform_0, window_bounds = array<i64: 54>}, {transform_indices = @transform_1, window_bounds = array<i64: 4, 1, 8, 128>}, {transform_indices = @transform_2, window_bounds = array<i64: 1, 1, 8, 128>}]} {
    %c0 = arith.constant 0 : index
    %0 = memref.load %arg1[%c0] : memref<54xf32, #tpu.memory_space<smem>>
    %c1 = arith.constant 1 : index
    %1 = memref.load %arg1[%c1] : memref<54xf32, #tpu.memory_space<smem>>
    %c2 = arith.constant 2 : index
    %2 = memref.load %arg1[%c2] : memref<54xf32, #tpu.memory_space<smem>>
    %c3 = arith.constant 3 : index
    %3 = memref.load %arg1[%c3] : memref<54xf32, #tpu.memory_space<smem>>
    %c4 = arith.constant 4 : index
    %4 = memref.load %arg1[%c4] : memref<54xf32, #tpu.memory_space<smem>>
    %c5 = arith.constant 5 : index
    %5 = memref.load %arg1[%c5] : memref<54xf32, #tpu.memory_space<smem>>
    %c6 = arith.constant 6 : index
    %6 = memref.load %arg1[%c6] : memref<54xf32, #tpu.memory_space<smem>>
    %c7 = arith.constant 7 : index
    %7 = memref.load %arg1[%c7] : memref<54xf32, #tpu.memory_space<smem>>
    %c8 = arith.constant 8 : index
    %8 = memref.load %arg1[%c8] : memref<54xf32, #tpu.memory_space<smem>>
    %c9 = arith.constant 9 : index
    %9 = memref.load %arg1[%c9] : memref<54xf32, #tpu.memory_space<smem>>
    %c10 = arith.constant 10 : index
    %10 = memref.load %arg1[%c10] : memref<54xf32, #tpu.memory_space<smem>>
    %c11 = arith.constant 11 : index
    %11 = memref.load %arg1[%c11] : memref<54xf32, #tpu.memory_space<smem>>
    %c12 = arith.constant 12 : index
    %12 = memref.load %arg1[%c12] : memref<54xf32, #tpu.memory_space<smem>>
    %c13 = arith.constant 13 : index
    %13 = memref.load %arg1[%c13] : memref<54xf32, #tpu.memory_space<smem>>
    %c14 = arith.constant 14 : index
    %14 = memref.load %arg1[%c14] : memref<54xf32, #tpu.memory_space<smem>>
    %c15 = arith.constant 15 : index
    %15 = memref.load %arg1[%c15] : memref<54xf32, #tpu.memory_space<smem>>
    %c16 = arith.constant 16 : index
    %16 = memref.load %arg1[%c16] : memref<54xf32, #tpu.memory_space<smem>>
    %c17 = arith.constant 17 : index
    %17 = memref.load %arg1[%c17] : memref<54xf32, #tpu.memory_space<smem>>
    %c18 = arith.constant 18 : index
    %18 = memref.load %arg1[%c18] : memref<54xf32, #tpu.memory_space<smem>>
    %c19 = arith.constant 19 : index
    %19 = memref.load %arg1[%c19] : memref<54xf32, #tpu.memory_space<smem>>
    %c20 = arith.constant 20 : index
    %20 = memref.load %arg1[%c20] : memref<54xf32, #tpu.memory_space<smem>>
    %c21 = arith.constant 21 : index
    %21 = memref.load %arg1[%c21] : memref<54xf32, #tpu.memory_space<smem>>
    %c22 = arith.constant 22 : index
    %22 = memref.load %arg1[%c22] : memref<54xf32, #tpu.memory_space<smem>>
    %c23 = arith.constant 23 : index
    %23 = memref.load %arg1[%c23] : memref<54xf32, #tpu.memory_space<smem>>
    %c24 = arith.constant 24 : index
    %24 = memref.load %arg1[%c24] : memref<54xf32, #tpu.memory_space<smem>>
    %c25 = arith.constant 25 : index
    %25 = memref.load %arg1[%c25] : memref<54xf32, #tpu.memory_space<smem>>
    %c26 = arith.constant 26 : index
    %26 = memref.load %arg1[%c26] : memref<54xf32, #tpu.memory_space<smem>>
    %c27 = arith.constant 27 : index
    %27 = memref.load %arg1[%c27] : memref<54xf32, #tpu.memory_space<smem>>
    %c28 = arith.constant 28 : index
    %28 = memref.load %arg1[%c28] : memref<54xf32, #tpu.memory_space<smem>>
    %c29 = arith.constant 29 : index
    %29 = memref.load %arg1[%c29] : memref<54xf32, #tpu.memory_space<smem>>
    %c30 = arith.constant 30 : index
    %30 = memref.load %arg1[%c30] : memref<54xf32, #tpu.memory_space<smem>>
    %c31 = arith.constant 31 : index
    %31 = memref.load %arg1[%c31] : memref<54xf32, #tpu.memory_space<smem>>
    %c32 = arith.constant 32 : index
    %32 = memref.load %arg1[%c32] : memref<54xf32, #tpu.memory_space<smem>>
    %c33 = arith.constant 33 : index
    %33 = memref.load %arg1[%c33] : memref<54xf32, #tpu.memory_space<smem>>
    %c34 = arith.constant 34 : index
    %34 = memref.load %arg1[%c34] : memref<54xf32, #tpu.memory_space<smem>>
    %c35 = arith.constant 35 : index
    %35 = memref.load %arg1[%c35] : memref<54xf32, #tpu.memory_space<smem>>
    %c36 = arith.constant 36 : index
    %36 = memref.load %arg1[%c36] : memref<54xf32, #tpu.memory_space<smem>>
    %c37 = arith.constant 37 : index
    %37 = memref.load %arg1[%c37] : memref<54xf32, #tpu.memory_space<smem>>
    %c38 = arith.constant 38 : index
    %38 = memref.load %arg1[%c38] : memref<54xf32, #tpu.memory_space<smem>>
    %c39 = arith.constant 39 : index
    %39 = memref.load %arg1[%c39] : memref<54xf32, #tpu.memory_space<smem>>
    %c40 = arith.constant 40 : index
    %40 = memref.load %arg1[%c40] : memref<54xf32, #tpu.memory_space<smem>>
    %c41 = arith.constant 41 : index
    %41 = memref.load %arg1[%c41] : memref<54xf32, #tpu.memory_space<smem>>
    %c42 = arith.constant 42 : index
    %42 = memref.load %arg1[%c42] : memref<54xf32, #tpu.memory_space<smem>>
    %c43 = arith.constant 43 : index
    %43 = memref.load %arg1[%c43] : memref<54xf32, #tpu.memory_space<smem>>
    %c44 = arith.constant 44 : index
    %44 = memref.load %arg1[%c44] : memref<54xf32, #tpu.memory_space<smem>>
    %c45 = arith.constant 45 : index
    %45 = memref.load %arg1[%c45] : memref<54xf32, #tpu.memory_space<smem>>
    %c46 = arith.constant 46 : index
    %46 = memref.load %arg1[%c46] : memref<54xf32, #tpu.memory_space<smem>>
    %c47 = arith.constant 47 : index
    %47 = memref.load %arg1[%c47] : memref<54xf32, #tpu.memory_space<smem>>
    %c48 = arith.constant 48 : index
    %48 = memref.load %arg1[%c48] : memref<54xf32, #tpu.memory_space<smem>>
    %c49 = arith.constant 49 : index
    %49 = memref.load %arg1[%c49] : memref<54xf32, #tpu.memory_space<smem>>
    %c50 = arith.constant 50 : index
    %50 = memref.load %arg1[%c50] : memref<54xf32, #tpu.memory_space<smem>>
    %c51 = arith.constant 51 : index
    %51 = memref.load %arg1[%c51] : memref<54xf32, #tpu.memory_space<smem>>
    %c52 = arith.constant 52 : index
    %52 = memref.load %arg1[%c52] : memref<54xf32, #tpu.memory_space<smem>>
    %c53 = arith.constant 53 : index
    %53 = memref.load %arg1[%c53] : memref<54xf32, #tpu.memory_space<smem>>
    %c0_i32 = arith.constant 0 : i32
    %c1_i32 = arith.constant 1 : i32
    %54 = arith.muli %c0_i32, %c1_i32 : i32
    %55 = tpu.assume_multiple %54, 1 : i32
    %c0_0 = arith.constant 0 : index
    %56 = arith.index_cast %55 : i32 to index
    %c0_1 = arith.constant 0 : index
    %c0_2 = arith.constant 0 : index
    %57 = vector.load %arg2[%c0_0, %56, %c0_1, %c0_2] : memref<4x1x8x128xf32, #tpu.memory_space<vmem>>, vector<1x1x8x128xf32>
    %58 = vector.shape_cast %57 : vector<1x1x8x128xf32> to vector<1x8x128xf32>
    %c1_3 = arith.constant 1 : index
    %59 = arith.index_cast %55 : i32 to index
    %c0_4 = arith.constant 0 : index
    %c0_5 = arith.constant 0 : index
    %60 = vector.load %arg2[%c1_3, %59, %c0_4, %c0_5] : memref<4x1x8x128xf32, #tpu.memory_space<vmem>>, vector<1x1x8x128xf32>
    %61 = vector.shape_cast %60 : vector<1x1x8x128xf32> to vector<1x8x128xf32>
    %c2_6 = arith.constant 2 : index
    %62 = arith.index_cast %55 : i32 to index
    %c0_7 = arith.constant 0 : index
    %c0_8 = arith.constant 0 : index
    %63 = vector.load %arg2[%c2_6, %62, %c0_7, %c0_8] : memref<4x1x8x128xf32, #tpu.memory_space<vmem>>, vector<1x1x8x128xf32>
    %64 = vector.shape_cast %63 : vector<1x1x8x128xf32> to vector<1x8x128xf32>
    %c3_9 = arith.constant 3 : index
    %65 = arith.index_cast %55 : i32 to index
    %c0_10 = arith.constant 0 : index
    %c0_11 = arith.constant 0 : index
    %66 = vector.load %arg2[%c3_9, %65, %c0_10, %c0_11] : memref<4x1x8x128xf32, #tpu.memory_space<vmem>>, vector<1x1x8x128xf32>
    %67 = vector.shape_cast %66 : vector<1x1x8x128xf32> to vector<1x8x128xf32>
    %68 = vector.broadcast %0 : f32 to vector<1x8x128xf32>
    %69 = arith.mulf %58, %68 : vector<1x8x128xf32>
    %70 = vector.broadcast %1 : f32 to vector<1x8x128xf32>
    %71 = arith.mulf %61, %70 : vector<1x8x128xf32>
    %72 = arith.addf %69, %71 : vector<1x8x128xf32>
    %73 = vector.broadcast %2 : f32 to vector<1x8x128xf32>
    %74 = arith.mulf %64, %73 : vector<1x8x128xf32>
    %75 = arith.addf %72, %74 : vector<1x8x128xf32>
    %76 = vector.broadcast %3 : f32 to vector<1x8x128xf32>
    %77 = arith.mulf %67, %76 : vector<1x8x128xf32>
    %78 = arith.addf %75, %77 : vector<1x8x128xf32>
    %79 = vector.broadcast %20 : f32 to vector<1x8x128xf32>
    %80 = arith.addf %78, %79 : vector<1x8x128xf32>
    %cst = arith.constant 0.000000e+00 : f32
    %81 = vector.broadcast %cst : f32 to vector<1x8x128xf32>
    %82 = arith.maximumf %80, %81 : vector<1x8x128xf32>
    %83 = vector.broadcast %4 : f32 to vector<1x8x128xf32>
    %84 = arith.mulf %58, %83 : vector<1x8x128xf32>
    %85 = vector.broadcast %5 : f32 to vector<1x8x128xf32>
    %86 = arith.mulf %61, %85 : vector<1x8x128xf32>
    %87 = arith.addf %84, %86 : vector<1x8x128xf32>
    %88 = vector.broadcast %6 : f32 to vector<1x8x128xf32>
    %89 = arith.mulf %64, %88 : vector<1x8x128xf32>
    %90 = arith.addf %87, %89 : vector<1x8x128xf32>
    %91 = vector.broadcast %7 : f32 to vector<1x8x128xf32>
    %92 = arith.mulf %67, %91 : vector<1x8x128xf32>
    %93 = arith.addf %90, %92 : vector<1x8x128xf32>
    %94 = vector.broadcast %21 : f32 to vector<1x8x128xf32>
    %95 = arith.addf %93, %94 : vector<1x8x128xf32>
    %cst_12 = arith.constant 0.000000e+00 : f32
    %96 = vector.broadcast %cst_12 : f32 to vector<1x8x128xf32>
    %97 = arith.maximumf %95, %96 : vector<1x8x128xf32>
    %98 = vector.broadcast %8 : f32 to vector<1x8x128xf32>
    %99 = arith.mulf %58, %98 : vector<1x8x128xf32>
    %100 = vector.broadcast %9 : f32 to vector<1x8x128xf32>
    %101 = arith.mulf %61, %100 : vector<1x8x128xf32>
    %102 = arith.addf %99, %101 : vector<1x8x128xf32>
    %103 = vector.broadcast %10 : f32 to vector<1x8x128xf32>
    %104 = arith.mulf %64, %103 : vector<1x8x128xf32>
    %105 = arith.addf %102, %104 : vector<1x8x128xf32>
    %106 = vector.broadcast %11 : f32 to vector<1x8x128xf32>
    %107 = arith.mulf %67, %106 : vector<1x8x128xf32>
    %108 = arith.addf %105, %107 : vector<1x8x128xf32>
    %109 = vector.broadcast %22 : f32 to vector<1x8x128xf32>
    %110 = arith.addf %108, %109 : vector<1x8x128xf32>
    %cst_13 = arith.constant 0.000000e+00 : f32
    %111 = vector.broadcast %cst_13 : f32 to vector<1x8x128xf32>
    %112 = arith.maximumf %110, %111 : vector<1x8x128xf32>
    %113 = vector.broadcast %12 : f32 to vector<1x8x128xf32>
    %114 = arith.mulf %58, %113 : vector<1x8x128xf32>
    %115 = vector.broadcast %13 : f32 to vector<1x8x128xf32>
    %116 = arith.mulf %61, %115 : vector<1x8x128xf32>
    %117 = arith.addf %114, %116 : vector<1x8x128xf32>
    %118 = vector.broadcast %14 : f32 to vector<1x8x128xf32>
    %119 = arith.mulf %64, %118 : vector<1x8x128xf32>
    %120 = arith.addf %117, %119 : vector<1x8x128xf32>
    %121 = vector.broadcast %15 : f32 to vector<1x8x128xf32>
    %122 = arith.mulf %67, %121 : vector<1x8x128xf32>
    %123 = arith.addf %120, %122 : vector<1x8x128xf32>
    %124 = vector.broadcast %23 : f32 to vector<1x8x128xf32>
    %125 = arith.addf %123, %124 : vector<1x8x128xf32>
    %cst_14 = arith.constant 0.000000e+00 : f32
    %126 = vector.broadcast %cst_14 : f32 to vector<1x8x128xf32>
    %127 = arith.maximumf %125, %126 : vector<1x8x128xf32>
    %128 = vector.broadcast %16 : f32 to vector<1x8x128xf32>
    %129 = arith.mulf %58, %128 : vector<1x8x128xf32>
    %130 = vector.broadcast %17 : f32 to vector<1x8x128xf32>
    %131 = arith.mulf %61, %130 : vector<1x8x128xf32>
    %132 = arith.addf %129, %131 : vector<1x8x128xf32>
    %133 = vector.broadcast %18 : f32 to vector<1x8x128xf32>
    %134 = arith.mulf %64, %133 : vector<1x8x128xf32>
    %135 = arith.addf %132, %134 : vector<1x8x128xf32>
    %136 = vector.broadcast %19 : f32 to vector<1x8x128xf32>
    %137 = arith.mulf %67, %136 : vector<1x8x128xf32>
    %138 = arith.addf %135, %137 : vector<1x8x128xf32>
    %139 = vector.broadcast %24 : f32 to vector<1x8x128xf32>
    %140 = arith.addf %138, %139 : vector<1x8x128xf32>
    %cst_15 = arith.constant 0.000000e+00 : f32
    %141 = vector.broadcast %cst_15 : f32 to vector<1x8x128xf32>
    %142 = arith.maximumf %140, %141 : vector<1x8x128xf32>
    %143 = vector.broadcast %25 : f32 to vector<1x8x128xf32>
    %144 = arith.mulf %82, %143 : vector<1x8x128xf32>
    %145 = vector.broadcast %26 : f32 to vector<1x8x128xf32>
    %146 = arith.mulf %97, %145 : vector<1x8x128xf32>
    %147 = arith.addf %144, %146 : vector<1x8x128xf32>
    %148 = vector.broadcast %27 : f32 to vector<1x8x128xf32>
    %149 = arith.mulf %112, %148 : vector<1x8x128xf32>
    %150 = arith.addf %147, %149 : vector<1x8x128xf32>
    %151 = vector.broadcast %28 : f32 to vector<1x8x128xf32>
    %152 = arith.mulf %127, %151 : vector<1x8x128xf32>
    %153 = arith.addf %150, %152 : vector<1x8x128xf32>
    %154 = vector.broadcast %29 : f32 to vector<1x8x128xf32>
    %155 = arith.mulf %142, %154 : vector<1x8x128xf32>
    %156 = arith.addf %153, %155 : vector<1x8x128xf32>
    %157 = vector.broadcast %45 : f32 to vector<1x8x128xf32>
    %158 = arith.addf %156, %157 : vector<1x8x128xf32>
    %cst_16 = arith.constant 0.000000e+00 : f32
    %159 = vector.broadcast %cst_16 : f32 to vector<1x8x128xf32>
    %160 = arith.maximumf %158, %159 : vector<1x8x128xf32>
    %161 = vector.broadcast %30 : f32 to vector<1x8x128xf32>
    %162 = arith.mulf %82, %161 : vector<1x8x128xf32>
    %163 = vector.broadcast %31 : f32 to vector<1x8x128xf32>
    %164 = arith.mulf %97, %163 : vector<1x8x128xf32>
    %165 = arith.addf %162, %164 : vector<1x8x128xf32>
    %166 = vector.broadcast %32 : f32 to vector<1x8x128xf32>
    %167 = arith.mulf %112, %166 : vector<1x8x128xf32>
    %168 = arith.addf %165, %167 : vector<1x8x128xf32>
    %169 = vector.broadcast %33 : f32 to vector<1x8x128xf32>
    %170 = arith.mulf %127, %169 : vector<1x8x128xf32>
    %171 = arith.addf %168, %170 : vector<1x8x128xf32>
    %172 = vector.broadcast %34 : f32 to vector<1x8x128xf32>
    %173 = arith.mulf %142, %172 : vector<1x8x128xf32>
    %174 = arith.addf %171, %173 : vector<1x8x128xf32>
    %175 = vector.broadcast %46 : f32 to vector<1x8x128xf32>
    %176 = arith.addf %174, %175 : vector<1x8x128xf32>
    %cst_17 = arith.constant 0.000000e+00 : f32
    %177 = vector.broadcast %cst_17 : f32 to vector<1x8x128xf32>
    %178 = arith.maximumf %176, %177 : vector<1x8x128xf32>
    %179 = vector.broadcast %35 : f32 to vector<1x8x128xf32>
    %180 = arith.mulf %82, %179 : vector<1x8x128xf32>
    %181 = vector.broadcast %36 : f32 to vector<1x8x128xf32>
    %182 = arith.mulf %97, %181 : vector<1x8x128xf32>
    %183 = arith.addf %180, %182 : vector<1x8x128xf32>
    %184 = vector.broadcast %37 : f32 to vector<1x8x128xf32>
    %185 = arith.mulf %112, %184 : vector<1x8x128xf32>
    %186 = arith.addf %183, %185 : vector<1x8x128xf32>
    %187 = vector.broadcast %38 : f32 to vector<1x8x128xf32>
    %188 = arith.mulf %127, %187 : vector<1x8x128xf32>
    %189 = arith.addf %186, %188 : vector<1x8x128xf32>
    %190 = vector.broadcast %39 : f32 to vector<1x8x128xf32>
    %191 = arith.mulf %142, %190 : vector<1x8x128xf32>
    %192 = arith.addf %189, %191 : vector<1x8x128xf32>
    %193 = vector.broadcast %47 : f32 to vector<1x8x128xf32>
    %194 = arith.addf %192, %193 : vector<1x8x128xf32>
    %cst_18 = arith.constant 0.000000e+00 : f32
    %195 = vector.broadcast %cst_18 : f32 to vector<1x8x128xf32>
    %196 = arith.maximumf %194, %195 : vector<1x8x128xf32>
    %197 = vector.broadcast %40 : f32 to vector<1x8x128xf32>
    %198 = arith.mulf %82, %197 : vector<1x8x128xf32>
    %199 = vector.broadcast %41 : f32 to vector<1x8x128xf32>
    %200 = arith.mulf %97, %199 : vector<1x8x128xf32>
    %201 = arith.addf %198, %200 : vector<1x8x128xf32>
    %202 = vector.broadcast %42 : f32 to vector<1x8x128xf32>
    %203 = arith.mulf %112, %202 : vector<1x8x128xf32>
    %204 = arith.addf %201, %203 : vector<1x8x128xf32>
    %205 = vector.broadcast %43 : f32 to vector<1x8x128xf32>
    %206 = arith.mulf %127, %205 : vector<1x8x128xf32>
    %207 = arith.addf %204, %206 : vector<1x8x128xf32>
    %208 = vector.broadcast %44 : f32 to vector<1x8x128xf32>
    %209 = arith.mulf %142, %208 : vector<1x8x128xf32>
    %210 = arith.addf %207, %209 : vector<1x8x128xf32>
    %211 = vector.broadcast %48 : f32 to vector<1x8x128xf32>
    %212 = arith.addf %210, %211 : vector<1x8x128xf32>
    %cst_19 = arith.constant 0.000000e+00 : f32
    %213 = vector.broadcast %cst_19 : f32 to vector<1x8x128xf32>
    %214 = arith.maximumf %212, %213 : vector<1x8x128xf32>
    %215 = vector.broadcast %49 : f32 to vector<1x8x128xf32>
    %216 = arith.mulf %160, %215 : vector<1x8x128xf32>
    %217 = vector.broadcast %50 : f32 to vector<1x8x128xf32>
    %218 = arith.mulf %178, %217 : vector<1x8x128xf32>
    %219 = arith.addf %216, %218 : vector<1x8x128xf32>
    %220 = vector.broadcast %51 : f32 to vector<1x8x128xf32>
    %221 = arith.mulf %196, %220 : vector<1x8x128xf32>
    %222 = arith.addf %219, %221 : vector<1x8x128xf32>
    %223 = vector.broadcast %52 : f32 to vector<1x8x128xf32>
    %224 = arith.mulf %214, %223 : vector<1x8x128xf32>
    %225 = arith.addf %222, %224 : vector<1x8x128xf32>
    %226 = vector.broadcast %53 : f32 to vector<1x8x128xf32>
    %227 = arith.addf %225, %226 : vector<1x8x128xf32>
    %c0_20 = arith.constant 0 : index
    %228 = arith.index_cast %55 : i32 to index
    %c0_21 = arith.constant 0 : index
    %c0_22 = arith.constant 0 : index
    %229 = vector.load %arg3[%c0_20, %228, %c0_21, %c0_22] : memref<1x1x8x128xf32, #tpu.memory_space<vmem>>, vector<1x1x8x128xf32>
    %230 = vector.shape_cast %229 : vector<1x1x8x128xf32> to vector<1x8x128xf32>
    %231 = vector.shape_cast %227 : vector<1x8x128xf32> to vector<1x1x8x128xf32>
    tpu.vector_store %arg3[%c0_20, %228, %c0_21, %c0_22], %231 {strides = array<i32>} : memref<1x1x8x128xf32, #tpu.memory_space<vmem>>, vector<1x1x8x128xf32>,
    %c1_i32_23 = arith.constant 1 : i32
    return
  }
  func.func @transform_0(%arg0: i32) -> i32 {
    %c0_i32 = arith.constant 0 : i32
    %c0_i32_0 = arith.constant 0 : i32
    return %c0_i32 : i32
  }
  func.func @transform_1(%arg0: i32) -> (i32, i32, i32, i32) {
    %c0_i32 = arith.constant 0 : i32
    %c0_i32_0 = arith.constant 0 : i32
    %c0_i32_1 = arith.constant 0 : i32
    %c0_i32_2 = arith.constant 0 : i32
    return %c0_i32, %arg0, %c0_i32_0, %c0_i32_1 : i32, i32, i32, i32
  }
  func.func @transform_2(%arg0: i32) -> (i32, i32, i32, i32) {
    %c0_i32 = arith.constant 0 : i32
    %c0_i32_0 = arith.constant 0 : i32
    %c0_i32_1 = arith.constant 0 : i32
    %c0_i32_2 = arith.constant 0 : i32
    return %c0_i32, %arg0, %c0_i32_0, %c0_i32_1 : i32, i32, i32, i32
  }
}

</mosaic_0001>

<llo_original>
// kernel: tpu_custom_call.1
$region0: #{tpu_custom_call.1}
  #allocation0 [shape = 'u32[]', space=smem, size = 0x4, offset = 0x4, fixed_abs, tag = 'smem constant byte address 0x4 - core index']
  #allocation1 [shape = 'u32[72,128]{1,0:T(1,128)}', space=vmem, size = 0x9000, scoped, tag = 'internal scratch']
  %s0 = inlined_call_operand.hbm [shape: f32[54], index: 0, kind: input, shape index: {}]
  %s1 = inlined_call_operand.hbm [shape: f32[4,1,8,128], index: 1, kind: input, shape index: {}]
  %s2 = inlined_call_operand.hbm [shape: f32[1,1,8,128], index: 2, kind: output, shape index: {}]
  %s3 = sld [smem:[#allocation0]]
  $region26: #{tpu_custom_call.1} parent=0
    _
  %s5 = ssub.s32 1, %s3
  %s6 = scalar_select 0, %s5, %s3
  $region1: #{tpu_custom_call.1} parent=0
    #allocation2 [shape = 'u8[512]{0}', space=smem, size = 0x200, scoped, tag = 'input window, operand 0, single buffered']
    #allocation3 [shape = 's32[1]{0}', space=sflag, size = 0x4, scoped, tag = 'scoped memory for tpu_custom_call.1']
    #allocation4 [shape = 's32[1]{0}', space=sflag, size = 0x4, scoped, tag = 'scoped memory for tpu_custom_call.1']
    #allocation5 [shape = 's32[1]{0}', space=sflag, size = 0x4, scoped, tag = 'scoped memory for tpu_custom_call.1']
    #allocation6 [shape = 'u8[16384]{0}', space=vmem, size = 0x4000, scoped, tag = 'input window, operand 1, single buffered']
    #allocation7 [shape = 'u8[4096]{0}', space=vmem, size = 0x1000, scoped, tag = 'output window, operand 0, single buffered']
    %7 = vsyncpa [#allocation5], 0
    %8 = vsyncpa [#allocation3], 0
    %9 = vsyncpa [#allocation4], 0
    // Predicated region
    $region2: #{tpu_custom_call.1} parent=1 // pred_check
      _
    $region3: #{tpu_custom_call.1} parent=1 // pred_check_branch
      %11 = sbr.rel (0) target = $region5
    $region4: #{tpu_custom_call.1} parent=1 // pred_region
      %13 = vsyncadd [#allocation5], 0
      %s15 = sshll.u32 %s0, 4
      %s16 = int_to_ptr.hbm [resolvable:$true] %s15
      %18 = dma.hbm_to_smem %s16, 16, [#allocation2], [#allocation5]
    $region5: #{tpu_custom_call.1} parent=1 // pred_fallthru
      _
    // Predicated region
    $region6: #{tpu_custom_call.1} parent=1 // pred_check
      _
    $region7: #{tpu_custom_call.1} parent=1 // pred_check_branch
      %20 = sbr.rel (0) target = $region9
    $region8: #{tpu_custom_call.1} parent=1 // pred_region
      %22 = vsyncadd [#allocation3], 0
      %s23 = sshll.u32 %s1, 4
      %s24 = int_to_ptr.hbm [resolvable:$true] %s23
      %s25 = sshll.u32 [#allocation6], 4
      %s26 = int_to_ptr.vmem [resolvable:$true] %s25
      %31 = dma.hbm_to_vmem [thread:$0]  %s24, 512, %s26, [#allocation3], 128, 128, 8
    $region9: #{tpu_custom_call.1} parent=1 // pred_fallthru
      _
    // Predicated region
    $region10: #{tpu_custom_call.1} parent=1 // pred_check
      _
    $region11: #{tpu_custom_call.1} parent=1 // pred_check_branch
      %33 = sbr.rel (0) target = $region13
    $region12: #{tpu_custom_call.1} parent=1 // pred_region
      %35 = dma.done [#allocation5], 16
    $region13: #{tpu_custom_call.1} parent=1 // pred_fallthru
      _
    // Predicated region
    $region14: #{tpu_custom_call.1} parent=1 // pred_check
      _
    $region15: #{tpu_custom_call.1} parent=1 // pred_check_branch
      %37 = sbr.rel (0) target = $region17
    $region16: #{tpu_custom_call.1} parent=1 // pred_region
      %39 = dma.done [#allocation3], 512
    $region17: #{tpu_custom_call.1} parent=1 // pred_fallthru
      _
    %40 = sfence
    %s41 = sld [smem:[#allocation2]]
    %s42 = sld [smem:[#allocation2 + $0x1]]
    %s43 = sld [smem:[#allocation2 + $0x2]]
    %s44 = sld [smem:[#allocation2 + $0x3]]
    %s45 = sld [smem:[#allocation2 + $0x4]]
    %s46 = sld [smem:[#allocation2 + $0x5]]
    %s47 = sld [smem:[#allocation2 + $0x6]]
    %s48 = sld [smem:[#allocation2 + $0x7]]
    %s49 = sld [smem:[#allocation2 + $0x8]]
    %s50 = sld [smem:[#allocation2 + $0x9]]
    %s51 = sld [smem:[#allocation2 + $0xa]]
    %s52 = sld [smem:[#allocation2 + $0xb]]
    %s53 = sld [smem:[#allocation2 + $0xc]]
    %s54 = sld [smem:[#allocation2 + $0xd]]
    %s55 = sld [smem:[#allocation2 + $0xe]]
    %s56 = sld [smem:[#allocation2 + $0xf]]
    %s57 = sld [smem:[#allocation2 + $0x10]]
    %s58 = sld [smem:[#allocation2 + $0x11]]
    %s59 = sld [smem:[#allocation2 + $0x12]]
    %s60 = sld [smem:[#allocation2 + $0x13]]
    %s61 = sld [smem:[#allocation2 + $0x14]]
    %s62 = sld [smem:[#allocation2 + $0x15]]
    %s63 = sld [smem:[#allocation2 + $0x16]]
    %s64 = sld [smem:[#allocation2 + $0x17]]
    %s65 = sld [smem:[#allocation2 + $0x18]]
    %s66 = sld [smem:[#allocation2 + $0x19]]
    %s67 = sld [smem:[#allocation2 + $0x1a]]
    %s68 = sld [smem:[#allocation2 + $0x1b]]
    %s69 = sld [smem:[#allocation2 + $0x1c]]
    %s70 = sld [smem:[#allocation2 + $0x1d]]
    %s71 = sld [smem:[#allocation2 + $0x1e]]
    %s72 = sld [smem:[#allocation2 + $0x1f]]
    %s73 = sld [smem:[#allocation2 + $0x20]]
    %s74 = sld [smem:[#allocation2 + $0x21]]
    %s75 = sld [smem:[#allocation2 + $0x22]]
    %s76 = sld [smem:[#allocation2 + $0x23]]
    %s77 = sld [smem:[#allocation2 + $0x24]]
    %s78 = sld [smem:[#allocation2 + $0x25]]
    %s79 = sld [smem:[#allocation2 + $0x26]]
    %s80 = sld [smem:[#allocation2 + $0x27]]
    %s81 = sld [smem:[#allocation2 + $0x28]]
    %s82 = sld [smem:[#allocation2 + $0x29]]
    %s83 = sld [smem:[#allocation2 + $0x2a]]
    %s84 = sld [smem:[#allocation2 + $0x2b]]
    %s85 = sld [smem:[#allocation2 + $0x2c]]
    %s86 = sld [smem:[#allocation2 + $0x2d]]
    %s87 = sld [smem:[#allocation2 + $0x2e]]
    %s88 = sld [smem:[#allocation2 + $0x2f]]
    %s89 = sld [smem:[#allocation2 + $0x30]]
    %s90 = sld [smem:[#allocation2 + $0x31]]
    %s91 = sld [smem:[#allocation2 + $0x32]]
    %s92 = sld [smem:[#allocation2 + $0x33]]
    %s93 = sld [smem:[#allocation2 + $0x34]]
    %s94 = sld [smem:[#allocation2 + $0x35]]
    %s95 = smul.u32 0, 8
    %s96 = scalar_lea.vmem [#allocation6], %s95
    %v97 = vld [vmem:[%s96] sm:$0xff]
    %s98 = sadd.s32 %s95, 8
    %s99 = scalar_lea.vmem [#allocation6], %s98
    %v100 = vld [vmem:[%s99] sm:$0xff]
    %s101 = sadd.s32 %s95, 16
    %s102 = scalar_lea.vmem [#allocation6], %s101
    %v103 = vld [vmem:[%s102] sm:$0xff]
    %s104 = sadd.s32 %s95, 24
    %s105 = scalar_lea.vmem [#allocation6], %s104
    %v106 = vld [vmem:[%s105] sm:$0xff]
    %v107 = vstv %s41
    %v108 = vmul.f32 %v97, %v107
    %v109 = vstv %s42
    %v110 = vmul.f32 %v100, %v109
    %v111 = vadd.f32 %v108, %v110
    %v112 = vstv %s43
    %v113 = vmul.f32 %v103, %v112
    %v114 = vadd.f32 %v111, %v113
    %v115 = vstv %s44
    %v116 = vmul.f32 %v106, %v115
    %v117 = vadd.f32 %v114, %v116
    %v118 = vstv %s61
    %v119 = vadd.f32 %v117, %v118
    %v120 = vmax.f32 %v119, 0.0
    %v121 = vstv %s45
    %v122 = vmul.f32 %v97, %v121
    %v123 = vstv %s46
    %v124 = vmul.f32 %v100, %v123
    %v125 = vadd.f32 %v122, %v124
    %v126 = vstv %s47
    %v127 = vmul.f32 %v103, %v126
    %v128 = vadd.f32 %v125, %v127
    %v129 = vstv %s48
    %v130 = vmul.f32 %v106, %v129
    %v131 = vadd.f32 %v128, %v130
    %v132 = vstv %s62
    %v133 = vadd.f32 %v131, %v132
    %v134 = vmax.f32 %v133, 0.0
    %v135 = vstv %s49
    %v136 = vmul.f32 %v97, %v135
    %v137 = vstv %s50
    %v138 = vmul.f32 %v100, %v137
    %v139 = vadd.f32 %v136, %v138
    %v140 = vstv %s51
    %v141 = vmul.f32 %v103, %v140
    %v142 = vadd.f32 %v139, %v141
    %v143 = vstv %s52
    %v144 = vmul.f32 %v106, %v143
    %v145 = vadd.f32 %v142, %v144
    %v146 = vstv %s63
    %v147 = vadd.f32 %v145, %v146
    %v148 = vmax.f32 %v147, 0.0
    %v149 = vstv %s53
    %v150 = vmul.f32 %v97, %v149
    %v151 = vstv %s54
    %v152 = vmul.f32 %v100, %v151
    %v153 = vadd.f32 %v150, %v152
    %v154 = vstv %s55
    %v155 = vmul.f32 %v103, %v154
    %v156 = vadd.f32 %v153, %v155
    %v157 = vstv %s56
    %v158 = vmul.f32 %v106, %v157
    %v159 = vadd.f32 %v156, %v158
    %v160 = vstv %s64
    %v161 = vadd.f32 %v159, %v160
    %v162 = vmax.f32 %v161, 0.0
    %v163 = vstv %s57
    %v164 = vmul.f32 %v97, %v163
    %v165 = vstv %s58
    %v166 = vmul.f32 %v100, %v165
    %v167 = vadd.f32 %v164, %v166
    %v168 = vstv %s59
    %v169 = vmul.f32 %v103, %v168
    %v170 = vadd.f32 %v167, %v169
    %v171 = vstv %s60
    %v172 = vmul.f32 %v106, %v171
    %v173 = vadd.f32 %v170, %v172
    %v174 = vstv %s65
    %v175 = vadd.f32 %v173, %v174
    %v176 = vmax.f32 %v175, 0.0
    %v177 = vstv %s66
    %v178 = vmul.f32 %v120, %v177
    %v179 = vstv %s67
    %v180 = vmul.f32 %v134, %v179
    %v181 = vadd.f32 %v178, %v180
    %v182 = vstv %s68
    %v183 = vmul.f32 %v148, %v182
    %v184 = vadd.f32 %v181, %v183
    %v185 = vstv %s69
    %v186 = vmul.f32 %v162, %v185
    %v187 = vadd.f32 %v184, %v186
    %v188 = vstv %s70
    %v189 = vmul.f32 %v176, %v188
    %v190 = vadd.f32 %v187, %v189
    %v191 = vstv %s86
    %v192 = vadd.f32 %v190, %v191
    %v193 = vmax.f32 %v192, 0.0
    %v194 = vstv %s71
    %v195 = vmul.f32 %v120, %v194
    %v196 = vstv %s72
    %v197 = vmul.f32 %v134, %v196
    %v198 = vadd.f32 %v195, %v197
    %v199 = vstv %s73
    %v200 = vmul.f32 %v148, %v199
    %v201 = vadd.f32 %v198, %v200
    %v202 = vstv %s74
    %v203 = vmul.f32 %v162, %v202
    %v204 = vadd.f32 %v201, %v203
    %v205 = vstv %s75
    %v206 = vmul.f32 %v176, %v205
    %v207 = vadd.f32 %v204, %v206
    %v208 = vstv %s87
    %v209 = vadd.f32 %v207, %v208
    %v210 = vmax.f32 %v209, 0.0
    %v211 = vstv %s76
    %v212 = vmul.f32 %v120, %v211
    %v213 = vstv %s77
    %v214 = vmul.f32 %v134, %v213
    %v215 = vadd.f32 %v212, %v214
    %v216 = vstv %s78
    %v217 = vmul.f32 %v148, %v216
    %v218 = vadd.f32 %v215, %v217
    %v219 = vstv %s79
    %v220 = vmul.f32 %v162, %v219
    %v221 = vadd.f32 %v218, %v220
    %v222 = vstv %s80
    %v223 = vmul.f32 %v176, %v222
    %v224 = vadd.f32 %v221, %v223
    %v225 = vstv %s88
    %v226 = vadd.f32 %v224, %v225
    %v227 = vmax.f32 %v226, 0.0
    %v228 = vstv %s81
    %v229 = vmul.f32 %v120, %v228
    %v230 = vstv %s82
    %v231 = vmul.f32 %v134, %v230
    %v232 = vadd.f32 %v229, %v231
    %v233 = vstv %s83
    %v234 = vmul.f32 %v148, %v233
    %v235 = vadd.f32 %v232, %v234
    %v236 = vstv %s84
    %v237 = vmul.f32 %v162, %v236
    %v238 = vadd.f32 %v235, %v237
    %v239 = vstv %s85
    %v240 = vmul.f32 %v176, %v239
    %v241 = vadd.f32 %v238, %v240
    %v242 = vstv %s89
    %v243 = vadd.f32 %v241, %v242
    %v244 = vmax.f32 %v243, 0.0
    %v245 = vstv %s90
    %v246 = vmul.f32 %v193, %v245
    %v247 = vstv %s91
    %v248 = vmul.f32 %v210, %v247
    %v249 = vadd.f32 %v246, %v248
    %v250 = vstv %s92
    %v251 = vmul.f32 %v227, %v250
    %v252 = vadd.f32 %v249, %v251
    %v253 = vstv %s93
    %v254 = vmul.f32 %v244, %v253
    %v255 = vadd.f32 %v252, %v254
    %v256 = vstv %s94
    %v257 = vadd.f32 %v255, %v256
    %s258 = scalar_lea.vmem [#allocation7], %s95
    %259 = vst [vmem:[%s258] sm:$0xff] %v257
    // Predicated region
    $region18: #{tpu_custom_call.1} parent=1 // pred_check
      _
    $region19: #{tpu_custom_call.1} parent=1 // pred_check_branch
      %261 = sbr.rel (0) target = $region21
    $region20: #{tpu_custom_call.1} parent=1 // pred_region
      %263 = vsyncadd [#allocation4], 0
      %s265 = sshll.u32 [#allocation7], 4
      %s266 = int_to_ptr.vmem [resolvable:$true] %s265
      %s267 = sshll.u32 %s2, 4
      %s268 = int_to_ptr.hbm [resolvable:$true] %s267
      %270 = dma.vmem_to_hbm [thread:$0]  %s266, 128, %s268, [#allocation4]
    $region21: #{tpu_custom_call.1} parent=1 // pred_fallthru
      _
    // Predicated region
    $region22: #{tpu_custom_call.1} parent=1 // pred_check
      _
    $region23: #{tpu_custom_call.1} parent=1 // pred_check_branch
      %272 = sbr.rel (0) target = $region25
    $region24: #{tpu_custom_call.1} parent=1 // pred_region
      %274 = dma.done [#allocation4], 128
    $region25: #{tpu_custom_call.1} parent=1 // pred_fallthru
      _
    %275 = vsyncpa [#allocation3], 1
    %276 = vsyncpa [#allocation4], 1
    %277 = vsyncpa [#allocation5], 1

</llo_original>
